<compile_context>
chip_gen: v6e
topology: v6e:2x2x1
jax: 0.10.0
libtpu: 0.0.40
codegen_flags: <defaults>
</compile_context>

<pallas_src>
import functools

import jax
import jax.numpy as jnp
from jax.experimental import pallas as pl
from jax.experimental.pallas import tpu as pltpu


def _round_up(v, m):
    return ((v + m - 1) // m) * m


def _ls_ce_kernel(x_ref, tgt_ref, out_ref,
                  m_acc, l_acc, picked_acc, sumx_acc,
                  *, smoothing, num_classes, class_tile):
    """Per row-block: streaming LSE over class tiles; emit per-row loss at the end."""
    j = pl.program_id(1)
    n_class_blocks = pl.num_programs(1)
    confidence = 1.0 - smoothing

    @pl.when(j == 0)
    def _():
        m_acc[...] = jnp.full(m_acc.shape, -jnp.inf, jnp.float32)
        l_acc[...] = jnp.zeros(l_acc.shape, jnp.float32)
        picked_acc[...] = jnp.zeros(picked_acc.shape, jnp.float32)
        sumx_acc[...] = jnp.zeros(sumx_acc.shape, jnp.float32)

    x = x_ref[...].astype(jnp.float32)                       # (TN, TC)
    tgt = tgt_ref[...]                                       # (TN, 1) int32

    # Global class ids of this tile; mask out padded lanes (>= num_classes).
    cls_ids = j * class_tile + jax.lax.broadcasted_iota(jnp.int32, x.shape, 1)
    valid = cls_ids < num_classes                            # (TN, TC)

    # --- online log-sum-exp update ------------------------------------------
    tile_max = jnp.max(jnp.where(valid, x, -jnp.inf), axis=-1, keepdims=True)
    m_prev = m_acc[...]
    m_new = jnp.maximum(m_prev, tile_max)
    alpha = jnp.exp(m_prev - m_new)                          # 0 on first step
    p = jnp.where(valid, jnp.exp(x - m_new), 0.0)
    l_acc[...] = alpha * l_acc[...] + jnp.sum(p, axis=-1, keepdims=True)
    m_acc[...] = m_new

    # --- running picked logit and sum of logits (no logprobs materialized) ---
    picked_acc[...] += jnp.sum(jnp.where(cls_ids == tgt, x, 0.0),
                               axis=-1, keepdims=True)
    sumx_acc[...] += jnp.sum(jnp.where(valid, x, 0.0),
                             axis=-1, keepdims=True)

    @pl.when(j == n_class_blocks - 1)
    def _():
        lse = m_acc[...] + jnp.log(l_acc[...])               # (TN, 1)
        nll = lse - picked_acc[...]                          # -logprob[target]
        smooth = lse - sumx_acc[...] * (1.0 / num_classes)   # -mean(logprobs)
        out_ref[...] = confidence * nll + smoothing * smooth


def label_smoothing_cross_entropy(x, target, smoothing=0.1,
                                  *, row_tile=256, class_tile=1024):
    """x: (N, C) float; target: (N,) int. Returns scalar float32 loss."""
    n, c = x.shape

    # Row tile: multiple of 8, capped (keeps VMEM small; grid pipelines rows).
    tn = min(row_tile, _round_up(n, 8))
    n_pad = _round_up(n, tn)

    # Class tile: lane-dense (multiple of 128). Small C -> single padded tile,
    # large C -> stream 'class_tile'-wide tiles with online LSE.
    c_128 = _round_up(c, 128)
    if c_128 <= 2 * class_tile:
        tc = c_128
        c_pad = c_128
    else:
        tc = class_tile
        c_pad = _round_up(c, tc)

    x_p = x
    if (n_pad, c_pad) != (n, c):
        x_p = jnp.pad(x, ((0, n_pad - n), (0, c_pad - c)))
    tgt_p = target.astype(jnp.int32)
    if n_pad != n:
        tgt_p = jnp.pad(tgt_p, (0, n_pad - n))
    tgt_p = tgt_p.reshape(n_pad, 1)

    kernel = functools.partial(_ls_ce_kernel,
                               smoothing=float(smoothing),
                               num_classes=c,
                               class_tile=tc)

    bytes_accessed = (x.size * x.dtype.itemsize) + (n * 4) + (n_pad * 4)
    cost = pl.CostEstimate(flops=6 * n * c,
                           transcendentals=n * c,
                           bytes_accessed=bytes_accessed)

    per_row = pl.pallas_call(
        kernel,
        out_shape=jax.ShapeDtypeStruct((n_pad, 1), jnp.float32),
        grid=(n_pad // tn, c_pad // tc),
        in_specs=[
            pl.BlockSpec((tn, tc), lambda i, j: (i, j)),   # logits tile
            pl.BlockSpec((tn, 1), lambda i, j: (i, 0)),    # targets (row block)
        ],
        out_specs=pl.BlockSpec((tn, 1), lambda i, j: (i, 0)),
        scratch_shapes=[pltpu.VMEM((tn, 1), jnp.float32)] * 4,
        compiler_params=pltpu.CompilerParams(
            dimension_semantics=("parallel", "arbitrary")),
        cost_estimate=cost,
    )(x_p, tgt_p)

    # Final mean over the true N rows (padded rows are sliced away).
    return jnp.mean(per_row[:n, 0])


def _reference(x, target, smoothing=0.1):
    confidence = 1.0 - smoothing
    logprobs = jax.nn.log_softmax(x.astype(jnp.float32), axis=-1)
    nll = -jnp.take_along_axis(logprobs, target[:, None].astype(jnp.int32),
                               axis=-1)[:, 0]
    smooth = -jnp.mean(logprobs, axis=-1)
    return jnp.mean(confidence * nll + smoothing * smooth)


if __name__ == "__main__":
    key = jax.random.PRNGKey(0)
    k1, k2, k3, k4 = jax.random.split(key, 4)

    # Test 1: small (8, 32) -- single lane-padded class tile, masked lanes.
    n1, c1 = 8, 32
    x1 = jax.random.normal(k1, (n1, c1), dtype=jnp.float32)
    t1 = jax.random.randint(k2, (n1,), 0, c1, dtype=jnp.int32)
    out1 = jax.block_until_ready(label_smoothing_cross_entropy(x1, t1, 0.1))
    ref1 = jax.block_until_ready(_reference(x1, t1, 0.1))
    assert jnp.allclose(out1, ref1, atol=2e-5, rtol=2e-5), (out1, ref1)

    # Test 2: row padding + multi-tile streaming LSE over classes.
    n2, c2 = 10, 2500
    x2 = jax.random.normal(k3, (n2, c2), dtype=jnp.float32) * 3.0
    t2 = jax.random.randint(k4, (n2,), 0, c2, dtype=jnp.int32)
    out2 = jax.block_until_ready(label_smoothing_cross_entropy(x2, t2, 0.1))
    ref2 = jax.block_until_ready(_reference(x2, t2, 0.1))
    assert jnp.allclose(out2, ref2, atol=2e-5, rtol=2e-5), (out2, ref2)

    print("KERNEL_OK")
</pallas_src>

<mosaic_0001>
module attributes {stable_mosaic.version = 11 : i64} {
  func.func @_ls_ce_kernel(%arg0: i32, %arg1: i32, %arg2: memref<8x128xf32, #tpu.memory_space<vmem>>, %arg3: memref<8x1xi32, #tpu.memory_space<vmem>>, %arg4: memref<8x1xf32, #tpu.memory_space<vmem>>, %arg5: memref<8x1xf32, #tpu.memory_space<vmem>>, %arg6: memref<8x1xf32, #tpu.memory_space<vmem>>, %arg7: memref<8x1xf32, #tpu.memory_space<vmem>>, %arg8: memref<8x1xf32, #tpu.memory_space<vmem>>) attributes {dimension_semantics = [#tpu.dimension_semantics<parallel>, #tpu.dimension_semantics<arbitrary>], iteration_bounds = array<i64: 1, 1>, scalar_prefetch = 0 : i64, scratch_operands = 4 : i64, tpu.core_type = #tpu.core_type<tc>, window_params = [{transform_indices = @transform_0, window_bounds = array<i64: 8, 128>}, {transform_indices = @transform_1, window_bounds = array<i64: 8, 1>}, {transform_indices = @transform_2, window_bounds = array<i64: 8, 1>}]} {
    %c0_i32 = arith.constant 0 : i32
    %0 = arith.cmpi eq, %arg1, %c0_i32 : i32
    %1 = arith.extui %0 : i1 to i32
    %c0_i32_0 = arith.constant 0 : i32
    %2 = arith.cmpi ne, %1, %c0_i32_0 : i32
    scf.if %2 {
      %cst_29 = arith.constant 0xFF800000 : f32
      %50 = vector.broadcast %cst_29 : f32 to vector<8x1xf32>
      %c0_30 = arith.constant 0 : index
      %c0_31 = arith.constant 0 : index
      %51 = vector.load %arg5[%c0_30, %c0_31] : memref<8x1xf32, #tpu.memory_space<vmem>>, vector<8x1xf32>
      tpu.vector_store %arg5[%c0_30, %c0_31], %50 {strides = array<i32>} : memref<8x1xf32, #tpu.memory_space<vmem>>, vector<8x1xf32>,
      %cst_32 = arith.constant 0.000000e+00 : f32
      %52 = vector.broadcast %cst_32 : f32 to vector<8x1xf32>
      %c0_33 = arith.constant 0 : index
      %c0_34 = arith.constant 0 : index
      %53 = vector.load %arg6[%c0_33, %c0_34] : memref<8x1xf32, #tpu.memory_space<vmem>>, vector<8x1xf32>
      tpu.vector_store %arg6[%c0_33, %c0_34], %52 {strides = array<i32>} : memref<8x1xf32, #tpu.memory_space<vmem>>, vector<8x1xf32>,
      %cst_35 = arith.constant 0.000000e+00 : f32
      %54 = vector.broadcast %cst_35 : f32 to vector<8x1xf32>
      %c0_36 = arith.constant 0 : index
      %c0_37 = arith.constant 0 : index
      %55 = vector.load %arg7[%c0_36, %c0_37] : memref<8x1xf32, #tpu.memory_space<vmem>>, vector<8x1xf32>
      tpu.vector_store %arg7[%c0_36, %c0_37], %54 {strides = array<i32>} : memref<8x1xf32, #tpu.memory_space<vmem>>, vector<8x1xf32>,
      %cst_38 = arith.constant 0.000000e+00 : f32
      %56 = vector.broadcast %cst_38 : f32 to vector<8x1xf32>
      %c0_39 = arith.constant 0 : index
      %c0_40 = arith.constant 0 : index
      %57 = vector.load %arg8[%c0_39, %c0_40] : memref<8x1xf32, #tpu.memory_space<vmem>>, vector<8x1xf32>
      tpu.vector_store %arg8[%c0_39, %c0_40], %56 {strides = array<i32>} : memref<8x1xf32, #tpu.memory_space<vmem>>, vector<8x1xf32>,
    } else {
    }
    %c0 = arith.constant 0 : index
    %c0_1 = arith.constant 0 : index
    %3 = vector.load %arg2[%c0, %c0_1] : memref<8x128xf32, #tpu.memory_space<vmem>>, vector<8x128xf32>
    %c0_2 = arith.constant 0 : index
    %c0_3 = arith.constant 0 : index
    %4 = vector.load %arg3[%c0_2, %c0_3] : memref<8x1xi32, #tpu.memory_space<vmem>>, vector<8x1xi32>
    %c128_i32 = arith.constant 128 : i32
    %5 = arith.muli %arg1, %c128_i32 : i32
    %6 = tpu.iota {dimensions = array<i32: 1>} : vector<8x128xi32>
    %7 = vector.broadcast %5 : i32 to vector<8x128xi32>
    %8 = arith.addi %7, %6 : vector<8x128xi32>
    %c32_i32 = arith.constant 32 : i32
    %9 = vector.broadcast %c32_i32 : i32 to vector<8x128xi32>
    %10 = arith.cmpi slt, %8, %9 : vector<8x128xi32>
    %cst = arith.constant 0xFF800000 : f32
    %11 = vector.broadcast %cst : f32 to vector<8x128xf32>
    %12 = arith.select %10, %3, %11 : vector<8x128xi1>, vector<8x128xf32>
    %cst_4 = arith.constant dense<0xFF800000> : vector<8xf32>
    %13 = vector.multi_reduction <maximumf>, %12, %cst_4 [1] : vector<8x128xf32> to vector<8xf32>
    %14 = vector.shape_cast %13 : vector<8xf32> to vector<8x1xf32>
    %c0_5 = arith.constant 0 : index
    %c0_6 = arith.constant 0 : index
    %15 = vector.load %arg5[%c0_5, %c0_6] : memref<8x1xf32, #tpu.memory_space<vmem>>, vector<8x1xf32>
    %16 = arith.maximumf %15, %14 : vector<8x1xf32>
    %17 = arith.subf %15, %16 : vector<8x1xf32>
    %18 = math.exp %17 : vector<8x1xf32>
    %19 = vector.broadcast %16 : vector<8x1xf32> to vector<8x128xf32>
    %20 = arith.subf %3, %19 : vector<8x128xf32>
    %21 = math.exp %20 : vector<8x128xf32>
    %cst_7 = arith.constant 0.000000e+00 : f32
    %22 = vector.broadcast %cst_7 : f32 to vector<8x128xf32>
    %23 = arith.select %10, %21, %22 : vector<8x128xi1>, vector<8x128xf32>
    %c0_8 = arith.constant 0 : index
    %c0_9 = arith.constant 0 : index
    %24 = vector.load %arg6[%c0_8, %c0_9] : memref<8x1xf32, #tpu.memory_space<vmem>>, vector<8x1xf32>
    %25 = arith.mulf %18, %24 : vector<8x1xf32>
    %cst_10 = arith.constant dense<0.000000e+00> : vector<8xf32>
    %26 = vector.multi_reduction <add>, %23, %cst_10 [1] : vector<8x128xf32> to vector<8xf32>
    %27 = vector.shape_cast %26 : vector<8xf32> to vector<8x1xf32>
    %28 = arith.addf %25, %27 : vector<8x1xf32>
    %c0_11 = arith.constant 0 : index
    %c0_12 = arith.constant 0 : index
    %29 = vector.load %arg6[%c0_11, %c0_12] : memref<8x1xf32, #tpu.memory_space<vmem>>, vector<8x1xf32>
    tpu.vector_store %arg6[%c0_11, %c0_12], %28 {strides = array<i32>} : memref<8x1xf32, #tpu.memory_space<vmem>>, vector<8x1xf32>,
    %c0_13 = arith.constant 0 : index
    %c0_14 = arith.constant 0 : index
    %30 = vector.load %arg5[%c0_13, %c0_14] : memref<8x1xf32, #tpu.memory_space<vmem>>, vector<8x1xf32>
    tpu.vector_store %arg5[%c0_13, %c0_14], %16 {strides = array<i32>} : memref<8x1xf32, #tpu.memory_space<vmem>>, vector<8x1xf32>,
    %c0_15 = arith.constant 0 : index
    %c0_16 = arith.constant 0 : index
    %31 = vector.load %arg7[%c0_15, %c0_16] : memref<8x1xf32, #tpu.memory_space<vmem>>, vector<8x1xf32>
    %32 = vector.broadcast %4 : vector<8x1xi32> to vector<8x128xi32>
    %33 = arith.cmpi eq, %8, %32 : vector<8x128xi32>
    %cst_17 = arith.constant 0.000000e+00 : f32
    %34 = vector.broadcast %cst_17 : f32 to vector<8x128xf32>
    %35 = arith.select %33, %3, %34 : vector<8x128xi1>, vector<8x128xf32>
    %cst_18 = arith.constant dense<0.000000e+00> : vector<8xf32>
    %36 = vector.multi_reduction <add>, %35, %cst_18 [1] : vector<8x128xf32> to vector<8xf32>
    %37 = vector.shape_cast %36 : vector<8xf32> to vector<8x1xf32>
    %38 = arith.addf %31, %37 : vector<8x1xf32>
    %c0_19 = arith.constant 0 : index
    %c0_20 = arith.constant 0 : index
    %39 = vector.load %arg7[%c0_19, %c0_20] : memref<8x1xf32, #tpu.memory_space<vmem>>, vector<8x1xf32>
    tpu.vector_store %arg7[%c0_19, %c0_20], %38 {strides = array<i32>} : memref<8x1xf32, #tpu.memory_space<vmem>>, vector<8x1xf32>,
    %c0_21 = arith.constant 0 : index
    %c0_22 = arith.constant 0 : index
    %40 = vector.load %arg8[%c0_21, %c0_22] : memref<8x1xf32, #tpu.memory_space<vmem>>, vector<8x1xf32>
    %cst_23 = arith.constant 0.000000e+00 : f32
    %41 = vector.broadcast %cst_23 : f32 to vector<8x128xf32>
    %42 = arith.select %10, %3, %41 : vector<8x128xi1>, vector<8x128xf32>
    %cst_24 = arith.constant dense<0.000000e+00> : vector<8xf32>
    %43 = vector.multi_reduction <add>, %42, %cst_24 [1] : vector<8x128xf32> to vector<8xf32>
    %44 = vector.shape_cast %43 : vector<8xf32> to vector<8x1xf32>
    %45 = arith.addf %40, %44 : vector<8x1xf32>
    %c0_25 = arith.constant 0 : index
    %c0_26 = arith.constant 0 : index
    %46 = vector.load %arg8[%c0_25, %c0_26] : memref<8x1xf32, #tpu.memory_space<vmem>>, vector<8x1xf32>
    tpu.vector_store %arg8[%c0_25, %c0_26], %45 {strides = array<i32>} : memref<8x1xf32, #tpu.memory_space<vmem>>, vector<8x1xf32>,
    %c0_i32_27 = arith.constant 0 : i32
    %47 = arith.cmpi eq, %arg1, %c0_i32_27 : i32
    %48 = arith.extui %47 : i1 to i32
    %c0_i32_28 = arith.constant 0 : i32
    %49 = arith.cmpi ne, %48, %c0_i32_28 : i32
    scf.if %49 {
      %c0_29 = arith.constant 0 : index
      %c0_30 = arith.constant 0 : index
      %50 = vector.load %arg5[%c0_29, %c0_30] : memref<8x1xf32, #tpu.memory_space<vmem>>, vector<8x1xf32>
      %c0_31 = arith.constant 0 : index
      %c0_32 = arith.constant 0 : index
      %51 = vector.load %arg6[%c0_31, %c0_32] : memref<8x1xf32, #tpu.memory_space<vmem>>, vector<8x1xf32>
      %52 = math.log %51 : vector<8x1xf32>
      %53 = arith.addf %50, %52 : vector<8x1xf32>
      %c0_33 = arith.constant 0 : index
      %c0_34 = arith.constant 0 : index
      %54 = vector.load %arg7[%c0_33, %c0_34] : memref<8x1xf32, #tpu.memory_space<vmem>>, vector<8x1xf32>
      %55 = arith.subf %53, %54 : vector<8x1xf32>
      %c0_35 = arith.constant 0 : index
      %c0_36 = arith.constant 0 : index
      %56 = vector.load %arg8[%c0_35, %c0_36] : memref<8x1xf32, #tpu.memory_space<vmem>>, vector<8x1xf32>
      %cst_37 = arith.constant 3.125000e-02 : f32
      %57 = vector.broadcast %cst_37 : f32 to vector<8x1xf32>
      %58 = arith.mulf %56, %57 : vector<8x1xf32>
      %59 = arith.subf %53, %58 : vector<8x1xf32>
      %cst_38 = arith.constant 0.899999976 : f32
      %60 = vector.broadcast %cst_38 : f32 to vector<8x1xf32>
      %61 = arith.mulf %60, %55 : vector<8x1xf32>
      %cst_39 = arith.constant 1.000000e-01 : f32
      %62 = vector.broadcast %cst_39 : f32 to vector<8x1xf32>
      %63 = arith.mulf %62, %59 : vector<8x1xf32>
      %64 = arith.addf %61, %63 : vector<8x1xf32>
      %c0_40 = arith.constant 0 : index
      %c0_41 = arith.constant 0 : index
      %65 = vector.load %arg4[%c0_40, %c0_41] : memref<8x1xf32, #tpu.memory_space<vmem>>, vector<8x1xf32>
      tpu.vector_store %arg4[%c0_40, %c0_41], %64 {strides = array<i32>} : memref<8x1xf32, #tpu.memory_space<vmem>>, vector<8x1xf32>,
    } else {
    }
    return
  }
  func.func @transform_0(%arg0: i32, %arg1: i32) -> (i32, i32) {
    %c0_i32 = arith.constant 0 : i32
    return %arg0, %arg1 : i32, i32
  }
  func.func @transform_1(%arg0: i32, %arg1: i32) -> (i32, i32) {
    %c0_i32 = arith.constant 0 : i32
    %c0_i32_0 = arith.constant 0 : i32
    return %arg0, %c0_i32 : i32, i32
  }
  func.func @transform_2(%arg0: i32, %arg1: i32) -> (i32, i32) {
    %c0_i32 = arith.constant 0 : i32
    %c0_i32_0 = arith.constant 0 : i32
    return %arg0, %c0_i32 : i32, i32
  }
}

</mosaic_0001>

<llo_original>
// kernel: tpu_custom_call.1
$region0: #{tpu_custom_call.1}
  #allocation0 [shape = 'u32[]', space=smem, size = 0x4, offset = 0x4, fixed_abs, tag = 'smem constant byte address 0x4 - core index']
  #allocation1 [shape = 'u32[144,128]{1,0:T(1,128)}', space=vmem, size = 0x12000, scoped, tag = 'internal scratch']
  #allocation2 [shape = 'f32[8,1]{1,0:T(8,128)}', space=vmem, size = 0x1000, scoped, tag = 'scratch operand']
  #allocation3 [shape = 'f32[8,1]{1,0:T(8,128)}', space=vmem, size = 0x1000, scoped, tag = 'scratch operand']
  #allocation4 [shape = 'f32[8,1]{1,0:T(8,128)}', space=vmem, size = 0x1000, scoped, tag = 'scratch operand']
  #allocation5 [shape = 'f32[8,1]{1,0:T(8,128)}', space=vmem, size = 0x1000, scoped, tag = 'scratch operand']
  %s0 = inlined_call_operand.vmem [shape: f32[8,128], index: 0, kind: input, shape index: {}]
  %s1 = inlined_call_operand.vmem [shape: s32[8,1], index: 1, kind: input, shape index: {}]
  %s2 = inlined_call_operand.vmem [shape: f32[8,1], index: 2, kind: output, shape index: {}]
  %s3 = sld [smem:[#allocation0]]
  $region26: #{tpu_custom_call.1} parent=0
    _
  %s5 = ssub.s32 1, %s3
  %s6 = scalar_select 0, %s5, %s3
  // Predicated region
  $region2: #{tpu_custom_call.1} parent=0 // pred_check
    _
  $region3: #{tpu_custom_call.1} parent=0 // pred_check_branch
    %8 = sbr.rel (0) target = $region5
  $region4: #{tpu_custom_call.1} parent=0 // pred_region
    _
  $region5: #{tpu_custom_call.1} parent=0 // pred_fallthru
    _
  // Predicated region
  $region6: #{tpu_custom_call.1} parent=0 // pred_check
    _
  $region7: #{tpu_custom_call.1} parent=0 // pred_check_branch
    %10 = sbr.rel (0) target = $region9
  $region8: #{tpu_custom_call.1} parent=0 // pred_region
    _
  $region9: #{tpu_custom_call.1} parent=0 // pred_fallthru
    _
  %p11 = scmp.eq.s32.totalorder 0, 0
  // Predicated region
  $region10: #{tpu_custom_call.1} parent=0 // pred_check
    %p12 = pneg %p11
  $region11: #{tpu_custom_call.1} parent=0 // pred_check_branch
    %14 = sbr.rel (%p12) target = $region13
  $region12: #{tpu_custom_call.1} parent=0 // pred_region
    %vm15 = vcmask 7168
    %16 = vst.msk [vmem:[#allocation2] sm:$0xff] %vm15, -inf
    %17 = vst.msk [vmem:[#allocation3] sm:$0xff] %vm15, 0.0
    %18 = vst.msk [vmem:[#allocation4] sm:$0xff] %vm15, 0.0
    %19 = vst.msk [vmem:[#allocation5] sm:$0xff] %vm15, 0.0
  $region13: #{tpu_custom_call.1} parent=0 // pred_fallthru
    _
  %v20 = vld [vmem:[%s0] sm:$0xff]
  %v21 = vld [vmem:[%s1] sm:$0xff]
  %s22 = smul.u32 0, 128
  %v23 = vlaneseq
  %v24 = vand.u32 %v23, 127
  %v25 = vstv %s22
  %v26 = vadd.s32 %v25, %v24
  %vm27 = vcmp.lt.s32.totalorder %v26, 32
  %v28 = vsel %vm27, %v20, -inf
  %29 = vmax.xlane.f32.xlu0 %v28
  %v30 = vpop.xlane.xlu0 %29
  %v31 = vld [vmem:[#allocation2] sm:$0xff]
  %v32 = vmax.f32 %v31, %v30
  %v33 = vsub.f32 %v31, %v32
  %v34 = vmul.f32 %v33, 1.442695
  %v35 = vpow.pop %v34
  %37 = vset.pattern.permute.xlu0 0
  %38 = vperm.xlu0 %37, %v32
  %v39 = vpop.permute.xlu0 %38
  %v41 = vsub.f32 %v20, %v39
  %v42 = vmul.f32 %v41, 1.442695
  %v43 = vpow.pop %v42
  %v44 = vsel %vm27, %v43, 0.0
  %v45 = vld [vmem:[#allocation3] sm:$0xff]
  %v46 = vmul.f32 %v35, %v45
  %47 = vadd.xlane.f32.xlu0 %v44
  %v48 = vpop.xlane.xlu0 %47
  %v49 = vadd.f32 %v46, %v48
  %vm50 = vcmask 7168
  %51 = vst.msk [vmem:[#allocation3] sm:$0xff] %vm50, %v49
  %52 = vst.msk [vmem:[#allocation2] sm:$0xff] %vm50, %v32
  %v53 = vld [vmem:[#allocation4] sm:$0xff]
  %54 = vset.pattern.permute.xlu0 0
  %55 = vperm.xlu0 %54, %v21
  %v56 = vpop.permute.xlu0 %55
  %vm57 = vcmp.eq.s32.totalorder %v26, %v56
  %v58 = vsel %vm57, %v20, 0.0
  %59 = vadd.xlane.f32.xlu0 %v58
  %v60 = vpop.xlane.xlu0 %59
  %v61 = vadd.f32 %v53, %v60
  %62 = vst.msk [vmem:[#allocation4] sm:$0xff] %vm50, %v61
  %v63 = vld [vmem:[#allocation5] sm:$0xff]
  %v64 = vsel %vm27, %v20, 0.0
  %65 = vadd.xlane.f32.xlu0 %v64
  %v66 = vpop.xlane.xlu0 %65
  %v67 = vadd.f32 %v63, %v66
  %68 = vst.msk [vmem:[#allocation5] sm:$0xff] %vm50, %v67
  // Predicated region
  $region14: #{tpu_custom_call.1} parent=0 // pred_check
    %p69 = pneg %p11
  $region15: #{tpu_custom_call.1} parent=0 // pred_check_branch
    %71 = sbr.rel (%p69) target = $region17
  $region16: #{tpu_custom_call.1} parent=0 // pred_region
    %v72 = vld [vmem:[#allocation2] sm:$0xff]
    %v73 = vld [vmem:[#allocation3] sm:$0xff]
    %v74 = vlog2.pop %v73
    %v75 = vmul.f32 %v74, 0.6931472
    %v76 = vadd.f32 %v72, %v75
    %v77 = vld [vmem:[#allocation4] sm:$0xff]
    %v78 = vsub.f32 %v76, %v77
    %v79 = vld [vmem:[#allocation5] sm:$0xff]
    %v80 = vmul.f32 %v79, 0.03125
    %v81 = vsub.f32 %v76, %v80
    %v82 = vmul.f32 %v78, 0.9
    %v83 = vmul.f32 %v81, 0.1
    %v84 = vadd.f32 %v82, %v83
    %85 = vst.msk [vmem:[%s2] sm:$0xff] %vm50, %v84
  $region17: #{tpu_custom_call.1} parent=0 // pred_fallthru
    _
  // Predicated region
  $region18: #{tpu_custom_call.1} parent=0 // pred_check
    _
  $region19: #{tpu_custom_call.1} parent=0 // pred_check_branch
    %87 = sbr.rel (0) target = $region21
  $region20: #{tpu_custom_call.1} parent=0 // pred_region
    _
  $region21: #{tpu_custom_call.1} parent=0 // pred_fallthru
    _
  // Predicated region
  $region22: #{tpu_custom_call.1} parent=0 // pred_check
    _
  $region23: #{tpu_custom_call.1} parent=0 // pred_check_branch
    %89 = sbr.rel (0) target = $region25
  $region24: #{tpu_custom_call.1} parent=0 // pred_region
    _
  $region25: #{tpu_custom_call.1} parent=0 // pred_fallthru
    _

</llo_original>
